<compile_context>
chip_gen: v5e
topology: v5e:2x2
jax: 0.10.0
libtpu: 0.0.40
codegen_flags: <defaults>
</compile_context>

<pallas_src>
import functools

import jax
import jax.numpy as jnp
from jax.experimental import pallas as pl
from jax.experimental.pallas import tpu as pltpu


def _rms_norm_kernel(x_ref, w_ref, o_ref, *, eps):
    # x_ref: (tile_rows, hidden), w_ref: (1, hidden), o_ref: (tile_rows, hidden)
    x = x_ref[...].astype(jnp.float32)
    # mean of squares over the hidden (last / lane) axis -> XLU reduce
    ms = jnp.mean(x * x, axis=-1, keepdims=True)
    inv = jax.lax.rsqrt(ms + eps)                 # EUP, free slot vs load/store
    w = w_ref[...].astype(jnp.float32)            # (1, hidden) broadcasts over rows
    o_ref[...] = (x * inv * w).astype(o_ref.dtype)


def _pick_tile_rows(rows, hidden, dtype):
    """Largest row tile that fits a conservative (v7x-safe) VMEM budget."""
    itemsize = jnp.dtype(dtype).itemsize
    # sublane packing multiple: f32 -> 8, bf16 -> 16, int8/fp8 -> 32
    mult = {4: 8, 2: 16, 1: 32}.get(itemsize, 8)
    # per-row VMEM bytes: double-buffered input + output tiles + ~2 f32 temps
    per_row = hidden * (2 * itemsize + 2 * itemsize + 8)
    budget = 32 * 1024 * 1024  # conservative so it also fits v7x (64 MiB physical)
    tile = (budget // per_row) // mult * mult
    tile = max(mult, min(tile, 2048))
    # don't allocate a tile bigger than the data actually needs
    tile = min(tile, pl.cdiv(rows, mult) * mult)
    return tile, per_row


def rms_norm_pallas(x, weight, eps=1e-6, *, tile_rows=None):
    """RMSNorm over the last axis. x: (..., n_embed), weight: (n_embed,)."""
    orig_shape = x.shape
    hidden = orig_shape[-1]
    rows = 1
    for d in orig_shape[:-1]:
        rows *= d

    x2d = x.reshape(rows, hidden)
    w2d = weight.reshape(1, hidden)

    auto_tile, per_row_bytes = _pick_tile_rows(rows, hidden, x.dtype)
    if tile_rows is None:
        tile_rows = auto_tile
    # TODO(synk): for very large hidden (>~64K) add a hidden-axis "arbitrary"
    # grid dim with a (tile_rows, 1) f32 scratch accumulator instead of one
    # full-hidden row slab per block.

    grid = (pl.cdiv(rows, tile_rows),)  # boundary block masked by Pallas; no pad/slice

    # Size the scoped-VMEM limit to the actual working set (+headroom), capped
    # well below v7x's 64 MiB physical VMEM.
    est_bytes = tile_rows * per_row_bytes + hidden * 4
    vmem_limit = int(min(48 * 1024 * 1024, max(8 * 1024 * 1024, est_bytes * 5 // 4)))

    out = pl.pallas_call(
        functools.partial(_rms_norm_kernel, eps=eps),
        out_shape=jax.ShapeDtypeStruct((rows, hidden), x.dtype),
        grid_spec=pltpu.PrefetchScalarGridSpec(
            num_scalar_prefetch=0,
            grid=grid,
            in_specs=[
                pl.BlockSpec((tile_rows, hidden), lambda i: (i, 0)),
                pl.BlockSpec((1, hidden), lambda i: (0, 0)),  # weight stays resident
            ],
            out_specs=pl.BlockSpec((tile_rows, hidden), lambda i: (i, 0)),
        ),
        compiler_params=pltpu.CompilerParams(
            dimension_semantics=("parallel",),   # lets v7x shard rows across its 2 TCs
            vmem_limit_bytes=vmem_limit,
        ),
    )(x2d, w2d)

    return out.reshape(orig_shape)


def rms_norm_ref(x, weight, eps=1e-6):
    xf = x.astype(jnp.float32)
    ms = jnp.mean(xf * xf, axis=-1, keepdims=True)
    return (xf * jax.lax.rsqrt(ms + eps) * weight.astype(jnp.float32)).astype(x.dtype)


if __name__ == "__main__":
    key = jax.random.PRNGKey(0)

    # Case 1: matches the torch module init (weight = ones), rows divisible by 8.
    batch, seq, n_embed = 2, 8, 128
    x = jax.random.normal(key, (batch, seq, n_embed), dtype=jnp.float32)
    weight = jnp.ones((n_embed,), dtype=jnp.float32)

    out = rms_norm_pallas(x, weight, eps=1e-6)
    jax.block_until_ready(out)
    ref = rms_norm_ref(x, weight, eps=1e-6)
    assert out.shape == x.shape
    assert jnp.allclose(out, ref, atol=1e-5, rtol=1e-5), "mismatch vs reference (ones weight)"

    # Case 2: non-trivial weight + row count NOT a multiple of the tile
    # (exercises the masked boundary block that replaced pad/slice).
    k1, k2 = jax.random.split(key)
    x2 = jax.random.normal(k1, (3, 5, n_embed), dtype=jnp.float32)   # rows = 15
    w2 = 0.5 + jax.random.uniform(k2, (n_embed,), dtype=jnp.float32)
    out2 = rms_norm_pallas(x2, w2, eps=1e-6)
    jax.block_until_ready(out2)
    ref2 = rms_norm_ref(x2, w2, eps=1e-6)
    assert out2.shape == x2.shape
    assert jnp.allclose(out2, ref2, atol=1e-5, rtol=1e-5), "mismatch vs reference (ragged rows)"

    print("KERNEL_OK")
</pallas_src>

<mosaic_0001>
module attributes {stable_mosaic.version = 11 : i64} {
  func.func @_rms_norm_kernel(%arg0: i32, %arg1: memref<16x128xf32, #tpu.memory_space<vmem>>, %arg2: memref<1x128xf32, #tpu.memory_space<vmem>>, %arg3: memref<16x128xf32, #tpu.memory_space<vmem>>) attributes {dimension_semantics = [#tpu.dimension_semantics<parallel>], iteration_bounds = array<i64: 1>, scalar_prefetch = 0 : i64, scratch_operands = 0 : i64, tpu.core_type = #tpu.core_type<tc>, window_params = [{transform_indices = @transform_0, window_bounds = array<i64: 16, 128>}, {pipeline_mode = #tpu.pipeline_mode<synchronous>, transform_indices = @transform_1, window_bounds = array<i64: 1, 128>}, {transform_indices = @transform_2, window_bounds = array<i64: 16, 128>}]} {
    %c0 = arith.constant 0 : index
    %c0_0 = arith.constant 0 : index
    %0 = vector.load %arg1[%c0, %c0_0] : memref<16x128xf32, #tpu.memory_space<vmem>>, vector<16x128xf32>
    %1 = arith.mulf %0, %0 : vector<16x128xf32>
    %cst = arith.constant dense<0.000000e+00> : vector<16xf32>
    %2 = vector.multi_reduction <add>, %1, %cst [1] : vector<16x128xf32> to vector<16xf32>
    %3 = vector.shape_cast %2 : vector<16xf32> to vector<16x1xf32>
    %cst_1 = arith.constant 1.280000e+02 : f32
    %4 = vector.broadcast %cst_1 : f32 to vector<16x1xf32>
    %5 = arith.divf %3, %4 : vector<16x1xf32>
    %cst_2 = arith.constant 9.99999997E-7 : f32
    %6 = vector.broadcast %cst_2 : f32 to vector<16x1xf32>
    %7 = arith.addf %5, %6 : vector<16x1xf32>
    %8 = math.rsqrt %7 : vector<16x1xf32>
    %c0_3 = arith.constant 0 : index
    %c0_4 = arith.constant 0 : index
    %9 = vector.load %arg2[%c0_3, %c0_4] : memref<1x128xf32, #tpu.memory_space<vmem>>, vector<1x128xf32>
    %10 = vector.broadcast %8 : vector<16x1xf32> to vector<16x128xf32>
    %11 = arith.mulf %0, %10 : vector<16x128xf32>
    %12 = vector.broadcast %9 : vector<1x128xf32> to vector<16x128xf32>
    %13 = arith.mulf %11, %12 : vector<16x128xf32>
    %c0_5 = arith.constant 0 : index
    %c0_6 = arith.constant 0 : index
    %14 = vector.load %arg3[%c0_5, %c0_6] : memref<16x128xf32, #tpu.memory_space<vmem>>, vector<16x128xf32>
    tpu.vector_store %arg3[%c0_5, %c0_6], %13 {strides = array<i32>} : memref<16x128xf32, #tpu.memory_space<vmem>>, vector<16x128xf32>,
    return
  }
  func.func @transform_0(%arg0: i32) -> (i32, i32) {
    %c0_i32 = arith.constant 0 : i32
    %c0_i32_0 = arith.constant 0 : i32
    return %arg0, %c0_i32 : i32, i32
  }
  func.func @transform_1(%arg0: i32) -> (i32, i32) {
    %c0_i32 = arith.constant 0 : i32
    %c0_i32_0 = arith.constant 0 : i32
    %c0_i32_1 = arith.constant 0 : i32
    return %c0_i32, %c0_i32_0 : i32, i32
  }
  func.func @transform_2(%arg0: i32) -> (i32, i32) {
    %c0_i32 = arith.constant 0 : i32
    %c0_i32_0 = arith.constant 0 : i32
    return %arg0, %c0_i32 : i32, i32
  }
}

</mosaic_0001>

<llo_original>
// kernel: tpu_custom_call.1
$region0: #{tpu_custom_call.1}
  #allocation0 [shape = 'u32[]', space=smem, size = 0x4, offset = 0x4, fixed_abs, tag = 'smem constant byte address 0x4 - core index']
  #allocation1 [shape = 'u32[72,128]{1,0:T(1,128)}', space=vmem, size = 0x9000, scoped, tag = 'internal scratch']
  %s0 = inlined_call_operand.hbm [shape: f32[16,128], index: 0, kind: input, shape index: {}]
  %s1 = inlined_call_operand.hbm [shape: f32[1,128], index: 1, kind: input, shape index: {}]
  %s2 = inlined_call_operand.hbm [shape: f32[16,128], index: 2, kind: output, shape index: {}]
  %s3 = sld [smem:[#allocation0]]
  $region26: #{tpu_custom_call.1} parent=0
    _
  %s5 = ssub.s32 1, %s3
  %s6 = scalar_select 0, %s5, %s3
  $region1: #{tpu_custom_call.1} parent=0
    #allocation2 [shape = 'u8[8192]{0}', space=vmem, size = 0x2000, scoped, tag = 'input window, operand 0, single buffered']
    #allocation3 [shape = 's32[1]{0}', space=sflag, size = 0x4, scoped, tag = 'scoped memory for tpu_custom_call.1']
    #allocation4 [shape = 's32[1]{0}', space=sflag, size = 0x4, scoped, tag = 'scoped memory for tpu_custom_call.1']
    #allocation5 [shape = 'u8[512]{0}', space=vmem, size = 0x400, scoped, tag = 'input window, operand 1, single buffered']
    #allocation6 [shape = 's32[1]{0}', space=sflag, size = 0x4, scoped, tag = 'scoped memory for tpu_custom_call.1']
    #allocation7 [shape = 'u8[8192]{0}', space=vmem, size = 0x2000, scoped, tag = 'output window, operand 0, single buffered']
    %7 = vsyncpa [#allocation3], 0
    %8 = vsyncpa [#allocation6], 0
    %9 = vsyncpa [#allocation4], 0
    // Predicated region
    $region2: #{tpu_custom_call.1} parent=1 // pred_check
      _
    $region3: #{tpu_custom_call.1} parent=1 // pred_check_branch
      %11 = sbr.rel (0) target = $region5
    $region4: #{tpu_custom_call.1} parent=1 // pred_region
      %13 = vsyncadd [#allocation3], 0
      %s14 = sshll.u32 %s0, 4
      %s15 = int_to_ptr.hbm [resolvable:$true] %s14
      %s16 = sshll.u32 [#allocation2], 4
      %s17 = int_to_ptr.vmem [resolvable:$true] %s16
      %22 = dma.hbm_to_vmem [thread:$0]  %s15, 256, %s17, [#allocation3], 128, 128, 8
    $region5: #{tpu_custom_call.1} parent=1 // pred_fallthru
      _
    // Predicated region
    $region6: #{tpu_custom_call.1} parent=1 // pred_check
      _
    $region7: #{tpu_custom_call.1} parent=1 // pred_check_branch
      %24 = sbr.rel (0) target = $region9
    $region8: #{tpu_custom_call.1} parent=1 // pred_region
      %26 = vsyncadd [#allocation6], 0
      %s28 = sshll.u32 %s1, 4
      %s29 = int_to_ptr.hbm [resolvable:$true] %s28
      %s30 = sshll.u32 [#allocation5], 4
      %s31 = int_to_ptr.vmem [resolvable:$true] %s30
      %33 = dma.hbm_to_vmem [thread:$0]  %s29, 16, %s31, [#allocation6]
    $region9: #{tpu_custom_call.1} parent=1 // pred_fallthru
      _
    // Predicated region
    $region10: #{tpu_custom_call.1} parent=1 // pred_check
      _
    $region11: #{tpu_custom_call.1} parent=1 // pred_check_branch
      %35 = sbr.rel (0) target = $region13
    $region12: #{tpu_custom_call.1} parent=1 // pred_region
      %37 = dma.done [#allocation3], 256
    $region13: #{tpu_custom_call.1} parent=1 // pred_fallthru
      _
    // Predicated region
    $region14: #{tpu_custom_call.1} parent=1 // pred_check
      _
    $region15: #{tpu_custom_call.1} parent=1 // pred_check_branch
      %39 = sbr.rel (0) target = $region17
    $region16: #{tpu_custom_call.1} parent=1 // pred_region
      %41 = dma.done [#allocation6], 16
    $region17: #{tpu_custom_call.1} parent=1 // pred_fallthru
      _
    %v42 = vld [vmem:[#allocation2] sm:$0xff]
    %v43 = vld [vmem:[#allocation2 + $0x8] sm:$0xff]
    %v44 = vmul.f32 %v42, %v42
    %v45 = vmul.f32 %v43, %v43
    %46 = vadd.xlane.f32.xlu0 %v44
    %v47 = vpop.xlane.xlu0 %46
    %48 = vadd.xlane.f32.xlu0 %v45
    %v49 = vpop.xlane.xlu0 %48
    %v50 = vrcp.pop 128.0
    %v51 = vmul.f32 128.0, %v50
    %v52 = vsub.f32 1.0, %v51
    %v53 = vmul.f32 %v50, %v52
    %v54 = vadd.f32 %v50, %v53
    %vm55 = vweird.f32 %v50
    %v56 = vsel %vm55, %v50, %v54
    %v57 = vmul.f32 %v47, %v56
    %v58 = vmul.f32 %v49, %v56
    %v59 = vadd.f32 %v57, 1e-06
    %v60 = vadd.f32 %v58, 1e-06
    %v61 = vrsqrt.pop %v59
    %v62 = vmul.f32 %v61, %v59
    %v63 = vmul.f32 %v62, %v61
    %v64 = vmul.f32 0.5, %v63
    %v65 = vsub.f32 1.5, %v64
    %v66 = vmul.f32 %v61, %v65
    %vm67 = vweird.f32 %v59
    %vm68 = vweird.f32 %v61
    %vm69 = vmor %vm67, %vm68
    %v70 = vsel %vm69, %v61, %v66
    %v71 = vrsqrt.pop %v60
    %v72 = vmul.f32 %v71, %v60
    %v73 = vmul.f32 %v72, %v71
    %v74 = vmul.f32 0.5, %v73
    %v75 = vsub.f32 1.5, %v74
    %v76 = vmul.f32 %v71, %v75
    %vm77 = vweird.f32 %v60
    %vm78 = vweird.f32 %v71
    %vm79 = vmor %vm77, %vm78
    %v80 = vsel %vm79, %v71, %v76
    %v81 = vld [vmem:[#allocation5] sm:$0x1]
    %v82 = vmul.f32 %v42, %v70
    %v83 = vmul.f32 %v43, %v80
    %v85 = vperm.slane %v81, 0
    %v87 = vmul.f32 %v82, %v85
    %v88 = vmul.f32 %v83, %v85
    %89 = vst [vmem:[#allocation7] sm:$0xff] %v87
    %90 = vst [vmem:[#allocation7 + $0x8] sm:$0xff] %v88
    // Predicated region
    $region18: #{tpu_custom_call.1} parent=1 // pred_check
      _
    $region19: #{tpu_custom_call.1} parent=1 // pred_check_branch
      %92 = sbr.rel (0) target = $region21
    $region20: #{tpu_custom_call.1} parent=1 // pred_region
      %94 = vsyncadd [#allocation4], 0
      %s95 = sshll.u32 [#allocation7], 4
      %s96 = int_to_ptr.vmem [resolvable:$true] %s95
      %s97 = sshll.u32 %s2, 4
      %s98 = int_to_ptr.hbm [resolvable:$true] %s97
      %103 = dma.vmem_to_hbm [thread:$0]  %s96, 256, %s98, [#allocation4], 128, 128, 8
    $region21: #{tpu_custom_call.1} parent=1 // pred_fallthru
      _
    // Predicated region
    $region22: #{tpu_custom_call.1} parent=1 // pred_check
      _
    $region23: #{tpu_custom_call.1} parent=1 // pred_check_branch
      %105 = sbr.rel (0) target = $region25
    $region24: #{tpu_custom_call.1} parent=1 // pred_region
      %107 = dma.done [#allocation4], 256
    $region25: #{tpu_custom_call.1} parent=1 // pred_fallthru
      _
    %108 = vsyncpa [#allocation3], 1
    %109 = vsyncpa [#allocation6], 1
    %110 = vsyncpa [#allocation4], 1

</llo_original>
